<compile_context>
chip_gen: v7x
topology: tpu7x:2x2x1
jax: 0.10.0
libtpu: 0.0.40
codegen_flags: <defaults>
</compile_context>

<pallas_src>
import functools

import jax
import jax.numpy as jnp
from jax.experimental import pallas as pl
from jax.experimental.pallas import tpu as pltpu


def _conv_bn_kernel(p_ref, x_ref, out_ref, *, cin, cout, k, eps):
    """Fused Conv1d (no bias) + BatchNorm1d (batch statistics, affine).

    p_ref:   (Cout*Cin*K + 2*Cout,) f32 in SMEM  — [conv taps | gamma | beta]
    x_ref:   (N, Cin, L)            f32 in VMEM  — PyTorch NCL layout
    out_ref: (N, Cout, L_out)       f32 in VMEM  — PyTorch NCL layout
    """
    n = x_ref.shape[0]
    l = x_ref.shape[2]
    l_out = l - k + 1
    w_len = cout * cin * k

    # Hoisted shifted tap slices: computed once, reused by every output channel.
    # Each channel slice is (N, L); each tap is then a pure lane slice.
    xs = []
    for c in range(cin):
        xc = x_ref[:, c, :]                                      # (N, L)
        xs.append([xc[:, kk:kk + l_out] for kk in range(k)])

    # Conv1d as a fully unrolled VPU broadcast-MAC with SMEM scalar weights,
    # stacked directly in the output (N, Cout, L_out) layout.
    accs = []
    for o in range(cout):
        acc = jnp.zeros((n, l_out), jnp.float32)
        for c in range(cin):
            for kk in range(k):
                acc = acc + p_ref[o * cin * k + c * k + kk] * xs[c][kk]
        accs.append(acc)
    conv = jnp.stack(accs, axis=1)                               # (N, Cout, L_out)

    # BatchNorm1d with track_running_stats=False: batch statistics over (N, L_out)
    # per output channel, biased variance, eps inside rsqrt. Batched reductions
    # over the whole slab; two-pass (x - mu)^2 variance avoids E[x^2]-E[x]^2
    # cancellation.
    inv_cnt = 1.0 / (n * l_out)
    mu = jnp.sum(jnp.sum(conv, axis=2, keepdims=True),
                 axis=0, keepdims=True) * inv_cnt                # (1, Cout, 1)
    d = conv - mu
    var = jnp.sum(jnp.sum(d * d, axis=2, keepdims=True),
                  axis=0, keepdims=True) * inv_cnt               # (1, Cout, 1)

    # gamma / beta live as SMEM scalars; materialize per-channel (1, Cout, 1)
    # vectors with iota+select (cheap VPU ops, no extra VMEM operands / DMAs).
    ch = jax.lax.broadcasted_iota(jnp.int32, (1, cout, 1), 1)
    gamma = jnp.zeros((1, cout, 1), jnp.float32)
    beta = jnp.zeros((1, cout, 1), jnp.float32)
    for o in range(cout):
        gamma = jnp.where(ch == o, p_ref[w_len + o], gamma)
        beta = jnp.where(ch == o, p_ref[w_len + cout + o], beta)

    # Folded affine epilogue: one mul + one add per element, single full store.
    scale = gamma * jax.lax.rsqrt(var + eps)                     # (1, Cout, 1)
    shift = beta - mu * scale
    out_ref[...] = conv * scale + shift


def conv1d_batchnorm(x, w, gamma, beta, eps=1e-5):
    """x: (N, Cin, L) f32, w: (Cout, Cin, K) f32, gamma/beta: (Cout,) f32.

    Returns (N, Cout, L_out) f32, matching
    nn.Sequential(Conv1d(Cin, Cout, K, bias=False),
                  BatchNorm1d(Cout, track_running_stats=False)) in train mode.
    """
    n, cin, l = x.shape
    cout, cin_w, k = w.shape
    assert cin_w == cin
    l_out = l - k + 1

    kernel = functools.partial(_conv_bn_kernel, cin=cin, cout=cout, k=k, eps=eps)

    # Single flat SMEM parameter vector: [conv taps | gamma | beta].
    params = jnp.concatenate([
        w.astype(jnp.float32).reshape(-1),
        gamma.astype(jnp.float32).reshape(-1),
        beta.astype(jnp.float32).reshape(-1),
    ])

    out = pl.pallas_call(
        kernel,
        out_shape=jax.ShapeDtypeStruct((n, cout, l_out), jnp.float32),
        in_specs=[
            pl.BlockSpec(memory_space=pltpu.MemorySpace.SMEM),   # packed scalars
            pl.BlockSpec(memory_space=pltpu.MemorySpace.VMEM),   # x (N, Cin, L)
        ],
        out_specs=pl.BlockSpec(memory_space=pltpu.MemorySpace.VMEM),
    )(params, x.astype(jnp.float32))

    return out  # already (N, Cout, L_out): no wrapper-side relayout


def _reference(x, w, gamma, beta, eps=1e-5):
    """Pure-JAX reference (conv via explicit sum + batch-stat batchnorm)."""
    n, cin, l = x.shape
    cout, _, k = w.shape
    l_out = l - k + 1
    conv = jnp.zeros((n, cout, l_out), jnp.float32)
    for kk in range(k):
        conv = conv + jnp.einsum("oc,ncl->nol", w[:, :, kk], x[:, :, kk:kk + l_out])
    mu = jnp.mean(conv, axis=(0, 2), keepdims=True)
    var = jnp.mean((conv - mu) ** 2, axis=(0, 2), keepdims=True)
    xhat = (conv - mu) * jax.lax.rsqrt(var + eps)
    return gamma[None, :, None] * xhat + beta[None, :, None]


if __name__ == "__main__":
    key = jax.random.PRNGKey(0)
    kx, kw = jax.random.split(key)

    # Small shapes consistent with the module: Conv1d in_channels=3, out=4, kernel=2.
    N, CIN, L = 2, 3, 16
    COUT, K = 4, 2

    x = jax.random.normal(kx, (N, CIN, L), dtype=jnp.float32)
    # Deterministic conv weight init (bias=False in the module).
    w = jax.random.normal(kw, (COUT, CIN, K), dtype=jnp.float32) * 0.1
    # BatchNorm1d default affine init: weight=1, bias=0.
    gamma = jnp.ones((COUT,), dtype=jnp.float32)
    beta = jnp.zeros((COUT,), dtype=jnp.float32)

    out = conv1d_batchnorm(x, w, gamma, beta)
    out = jax.block_until_ready(out)

    ref = _reference(x, w, gamma, beta)
    assert out.shape == (N, COUT, L - K + 1)
    assert jnp.allclose(out, ref, atol=1e-5, rtol=1e-5), "mismatch vs reference"

    print("KERNEL_OK")
</pallas_src>

<mosaic_0001>
module attributes {stable_mosaic.version = 11 : i64} {
  func.func @_conv_bn_kernel(%arg0: memref<32xf32, #tpu.memory_space<smem>>, %arg1: memref<2x3x16xf32, #tpu.memory_space<vmem>>, %arg2: memref<2x4x15xf32, #tpu.memory_space<vmem>>) attributes {dimension_semantics = [], scalar_prefetch = 0 : i64, scratch_operands = 0 : i64, tpu.core_type = #tpu.core_type<tc>} {
    %c0 = arith.constant 0 : index
    %c0_0 = arith.constant 0 : index
    %c0_1 = arith.constant 0 : index
    %0 = vector.load %arg1[%c0, %c0_0, %c0_1] : memref<2x3x16xf32, #tpu.memory_space<vmem>>, vector<2x1x16xf32>
    %1 = vector.shape_cast %0 : vector<2x1x16xf32> to vector<2x16xf32>
    %2 = vector.extract_strided_slice %1 {offsets = [0, 0], sizes = [2, 15], strides = [1, 1]} : vector<2x16xf32> to vector<2x15xf32>
    %3 = vector.extract_strided_slice %1 {offsets = [0, 1], sizes = [2, 15], strides = [1, 1]} : vector<2x16xf32> to vector<2x15xf32>
    %c0_2 = arith.constant 0 : index
    %c1 = arith.constant 1 : index
    %c0_3 = arith.constant 0 : index
    %4 = vector.load %arg1[%c0_2, %c1, %c0_3] : memref<2x3x16xf32, #tpu.memory_space<vmem>>, vector<2x1x16xf32>
    %5 = vector.shape_cast %4 : vector<2x1x16xf32> to vector<2x16xf32>
    %6 = vector.extract_strided_slice %5 {offsets = [0, 0], sizes = [2, 15], strides = [1, 1]} : vector<2x16xf32> to vector<2x15xf32>
    %7 = vector.extract_strided_slice %5 {offsets = [0, 1], sizes = [2, 15], strides = [1, 1]} : vector<2x16xf32> to vector<2x15xf32>
    %c0_4 = arith.constant 0 : index
    %c2 = arith.constant 2 : index
    %c0_5 = arith.constant 0 : index
    %8 = vector.load %arg1[%c0_4, %c2, %c0_5] : memref<2x3x16xf32, #tpu.memory_space<vmem>>, vector<2x1x16xf32>
    %9 = vector.shape_cast %8 : vector<2x1x16xf32> to vector<2x16xf32>
    %10 = vector.extract_strided_slice %9 {offsets = [0, 0], sizes = [2, 15], strides = [1, 1]} : vector<2x16xf32> to vector<2x15xf32>
    %11 = vector.extract_strided_slice %9 {offsets = [0, 1], sizes = [2, 15], strides = [1, 1]} : vector<2x16xf32> to vector<2x15xf32>
    %cst = arith.constant 0.000000e+00 : f32
    %12 = vector.broadcast %cst : f32 to vector<2x15xf32>
    %c0_6 = arith.constant 0 : index
    %13 = memref.load %arg0[%c0_6] : memref<32xf32, #tpu.memory_space<smem>>
    %14 = vector.broadcast %13 : f32 to vector<2x15xf32>
    %15 = arith.mulf %14, %2 : vector<2x15xf32>
    %16 = arith.addf %12, %15 : vector<2x15xf32>
    %c1_7 = arith.constant 1 : index
    %17 = memref.load %arg0[%c1_7] : memref<32xf32, #tpu.memory_space<smem>>
    %18 = vector.broadcast %17 : f32 to vector<2x15xf32>
    %19 = arith.mulf %18, %3 : vector<2x15xf32>
    %20 = arith.addf %16, %19 : vector<2x15xf32>
    %c2_8 = arith.constant 2 : index
    %21 = memref.load %arg0[%c2_8] : memref<32xf32, #tpu.memory_space<smem>>
    %22 = vector.broadcast %21 : f32 to vector<2x15xf32>
    %23 = arith.mulf %22, %6 : vector<2x15xf32>
    %24 = arith.addf %20, %23 : vector<2x15xf32>
    %c3 = arith.constant 3 : index
    %25 = memref.load %arg0[%c3] : memref<32xf32, #tpu.memory_space<smem>>
    %26 = vector.broadcast %25 : f32 to vector<2x15xf32>
    %27 = arith.mulf %26, %7 : vector<2x15xf32>
    %28 = arith.addf %24, %27 : vector<2x15xf32>
    %c4 = arith.constant 4 : index
    %29 = memref.load %arg0[%c4] : memref<32xf32, #tpu.memory_space<smem>>
    %30 = vector.broadcast %29 : f32 to vector<2x15xf32>
    %31 = arith.mulf %30, %10 : vector<2x15xf32>
    %32 = arith.addf %28, %31 : vector<2x15xf32>
    %c5 = arith.constant 5 : index
    %33 = memref.load %arg0[%c5] : memref<32xf32, #tpu.memory_space<smem>>
    %34 = vector.broadcast %33 : f32 to vector<2x15xf32>
    %35 = arith.mulf %34, %11 : vector<2x15xf32>
    %36 = arith.addf %32, %35 : vector<2x15xf32>
    %cst_9 = arith.constant 0.000000e+00 : f32
    %37 = vector.broadcast %cst_9 : f32 to vector<2x15xf32>
    %c6 = arith.constant 6 : index
    %38 = memref.load %arg0[%c6] : memref<32xf32, #tpu.memory_space<smem>>
    %39 = vector.broadcast %38 : f32 to vector<2x15xf32>
    %40 = arith.mulf %39, %2 : vector<2x15xf32>
    %41 = arith.addf %37, %40 : vector<2x15xf32>
    %c7 = arith.constant 7 : index
    %42 = memref.load %arg0[%c7] : memref<32xf32, #tpu.memory_space<smem>>
    %43 = vector.broadcast %42 : f32 to vector<2x15xf32>
    %44 = arith.mulf %43, %3 : vector<2x15xf32>
    %45 = arith.addf %41, %44 : vector<2x15xf32>
    %c8 = arith.constant 8 : index
    %46 = memref.load %arg0[%c8] : memref<32xf32, #tpu.memory_space<smem>>
    %47 = vector.broadcast %46 : f32 to vector<2x15xf32>
    %48 = arith.mulf %47, %6 : vector<2x15xf32>
    %49 = arith.addf %45, %48 : vector<2x15xf32>
    %c9 = arith.constant 9 : index
    %50 = memref.load %arg0[%c9] : memref<32xf32, #tpu.memory_space<smem>>
    %51 = vector.broadcast %50 : f32 to vector<2x15xf32>
    %52 = arith.mulf %51, %7 : vector<2x15xf32>
    %53 = arith.addf %49, %52 : vector<2x15xf32>
    %c10 = arith.constant 10 : index
    %54 = memref.load %arg0[%c10] : memref<32xf32, #tpu.memory_space<smem>>
    %55 = vector.broadcast %54 : f32 to vector<2x15xf32>
    %56 = arith.mulf %55, %10 : vector<2x15xf32>
    %57 = arith.addf %53, %56 : vector<2x15xf32>
    %c11 = arith.constant 11 : index
    %58 = memref.load %arg0[%c11] : memref<32xf32, #tpu.memory_space<smem>>
    %59 = vector.broadcast %58 : f32 to vector<2x15xf32>
    %60 = arith.mulf %59, %11 : vector<2x15xf32>
    %61 = arith.addf %57, %60 : vector<2x15xf32>
    %cst_10 = arith.constant 0.000000e+00 : f32
    %62 = vector.broadcast %cst_10 : f32 to vector<2x15xf32>
    %c12 = arith.constant 12 : index
    %63 = memref.load %arg0[%c12] : memref<32xf32, #tpu.memory_space<smem>>
    %64 = vector.broadcast %63 : f32 to vector<2x15xf32>
    %65 = arith.mulf %64, %2 : vector<2x15xf32>
    %66 = arith.addf %62, %65 : vector<2x15xf32>
    %c13 = arith.constant 13 : index
    %67 = memref.load %arg0[%c13] : memref<32xf32, #tpu.memory_space<smem>>
    %68 = vector.broadcast %67 : f32 to vector<2x15xf32>
    %69 = arith.mulf %68, %3 : vector<2x15xf32>
    %70 = arith.addf %66, %69 : vector<2x15xf32>
    %c14 = arith.constant 14 : index
    %71 = memref.load %arg0[%c14] : memref<32xf32, #tpu.memory_space<smem>>
    %72 = vector.broadcast %71 : f32 to vector<2x15xf32>
    %73 = arith.mulf %72, %6 : vector<2x15xf32>
    %74 = arith.addf %70, %73 : vector<2x15xf32>
    %c15 = arith.constant 15 : index
    %75 = memref.load %arg0[%c15] : memref<32xf32, #tpu.memory_space<smem>>
    %76 = vector.broadcast %75 : f32 to vector<2x15xf32>
    %77 = arith.mulf %76, %7 : vector<2x15xf32>
    %78 = arith.addf %74, %77 : vector<2x15xf32>
    %c16 = arith.constant 16 : index
    %79 = memref.load %arg0[%c16] : memref<32xf32, #tpu.memory_space<smem>>
    %80 = vector.broadcast %79 : f32 to vector<2x15xf32>
    %81 = arith.mulf %80, %10 : vector<2x15xf32>
    %82 = arith.addf %78, %81 : vector<2x15xf32>
    %c17 = arith.constant 17 : index
    %83 = memref.load %arg0[%c17] : memref<32xf32, #tpu.memory_space<smem>>
    %84 = vector.broadcast %83 : f32 to vector<2x15xf32>
    %85 = arith.mulf %84, %11 : vector<2x15xf32>
    %86 = arith.addf %82, %85 : vector<2x15xf32>
    %cst_11 = arith.constant 0.000000e+00 : f32
    %87 = vector.broadcast %cst_11 : f32 to vector<2x15xf32>
    %c18 = arith.constant 18 : index
    %88 = memref.load %arg0[%c18] : memref<32xf32, #tpu.memory_space<smem>>
    %89 = vector.broadcast %88 : f32 to vector<2x15xf32>
    %90 = arith.mulf %89, %2 : vector<2x15xf32>
    %91 = arith.addf %87, %90 : vector<2x15xf32>
    %c19 = arith.constant 19 : index
    %92 = memref.load %arg0[%c19] : memref<32xf32, #tpu.memory_space<smem>>
    %93 = vector.broadcast %92 : f32 to vector<2x15xf32>
    %94 = arith.mulf %93, %3 : vector<2x15xf32>
    %95 = arith.addf %91, %94 : vector<2x15xf32>
    %c20 = arith.constant 20 : index
    %96 = memref.load %arg0[%c20] : memref<32xf32, #tpu.memory_space<smem>>
    %97 = vector.broadcast %96 : f32 to vector<2x15xf32>
    %98 = arith.mulf %97, %6 : vector<2x15xf32>
    %99 = arith.addf %95, %98 : vector<2x15xf32>
    %c21 = arith.constant 21 : index
    %100 = memref.load %arg0[%c21] : memref<32xf32, #tpu.memory_space<smem>>
    %101 = vector.broadcast %100 : f32 to vector<2x15xf32>
    %102 = arith.mulf %101, %7 : vector<2x15xf32>
    %103 = arith.addf %99, %102 : vector<2x15xf32>
    %c22 = arith.constant 22 : index
    %104 = memref.load %arg0[%c22] : memref<32xf32, #tpu.memory_space<smem>>
    %105 = vector.broadcast %104 : f32 to vector<2x15xf32>
    %106 = arith.mulf %105, %10 : vector<2x15xf32>
    %107 = arith.addf %103, %106 : vector<2x15xf32>
    %c23 = arith.constant 23 : index
    %108 = memref.load %arg0[%c23] : memref<32xf32, #tpu.memory_space<smem>>
    %109 = vector.broadcast %108 : f32 to vector<2x15xf32>
    %110 = arith.mulf %109, %11 : vector<2x15xf32>
    %111 = arith.addf %107, %110 : vector<2x15xf32>
    %112 = vector.shape_cast %36 : vector<2x15xf32> to vector<2x1x15xf32>
    %113 = vector.shape_cast %61 : vector<2x15xf32> to vector<2x1x15xf32>
    %114 = vector.shape_cast %86 : vector<2x15xf32> to vector<2x1x15xf32>
    %115 = vector.shape_cast %111 : vector<2x15xf32> to vector<2x1x15xf32>
    %116 = tpu.concatenate %112, %113, %114, %115 in 1 : vector<2x1x15xf32>, vector<2x1x15xf32>, vector<2x1x15xf32>, vector<2x1x15xf32> -> vector<2x4x15xf32>
    %cst_12 = arith.constant dense<0.000000e+00> : vector<2x4xf32>
    %117 = vector.multi_reduction <add>, %116, %cst_12 [2] : vector<2x4x15xf32> to vector<2x4xf32>
    %118 = vector.shape_cast %117 : vector<2x4xf32> to vector<2x4x1xf32>
    %cst_13 = arith.constant dense<0.000000e+00> : vector<4x1xf32>
    %119 = vector.multi_reduction <add>, %118, %cst_13 [0] : vector<2x4x1xf32> to vector<4x1xf32>
    %120 = vector.shape_cast %119 : vector<4x1xf32> to vector<1x4x1xf32>
    %cst_14 = arith.constant 0.0333333351 : f32
    %121 = vector.broadcast %cst_14 : f32 to vector<1x4x1xf32>
    %122 = arith.mulf %120, %121 : vector<1x4x1xf32>
    %123 = vector.broadcast %122 : vector<1x4x1xf32> to vector<2x4x15xf32>
    %124 = arith.subf %116, %123 : vector<2x4x15xf32>
    %125 = arith.mulf %124, %124 : vector<2x4x15xf32>
    %cst_15 = arith.constant dense<0.000000e+00> : vector<2x4xf32>
    %126 = vector.multi_reduction <add>, %125, %cst_15 [2] : vector<2x4x15xf32> to vector<2x4xf32>
    %127 = vector.shape_cast %126 : vector<2x4xf32> to vector<2x4x1xf32>
    %cst_16 = arith.constant dense<0.000000e+00> : vector<4x1xf32>
    %128 = vector.multi_reduction <add>, %127, %cst_16 [0] : vector<2x4x1xf32> to vector<4x1xf32>
    %129 = vector.shape_cast %128 : vector<4x1xf32> to vector<1x4x1xf32>
    %cst_17 = arith.constant 0.0333333351 : f32
    %130 = vector.broadcast %cst_17 : f32 to vector<1x4x1xf32>
    %131 = arith.mulf %129, %130 : vector<1x4x1xf32>
    %132 = tpu.iota {dimensions = array<i32: 1>} : vector<1x4x1xi32>
    %cst_18 = arith.constant 0.000000e+00 : f32
    %133 = vector.broadcast %cst_18 : f32 to vector<1x4x1xf32>
    %cst_19 = arith.constant 0.000000e+00 : f32
    %134 = vector.broadcast %cst_19 : f32 to vector<1x4x1xf32>
    %c0_i32 = arith.constant 0 : i32
    %135 = vector.broadcast %c0_i32 : i32 to vector<1x4x1xi32>
    %136 = arith.cmpi eq, %132, %135 : vector<1x4x1xi32>
    %c24 = arith.constant 24 : index
    %137 = memref.load %arg0[%c24] : memref<32xf32, #tpu.memory_space<smem>>
    %138 = vector.broadcast %137 : f32 to vector<1x4x1xf32>
    %139 = arith.select %136, %138, %133 : vector<1x4x1xi1>, vector<1x4x1xf32>
    %c0_i32_20 = arith.constant 0 : i32
    %140 = vector.broadcast %c0_i32_20 : i32 to vector<1x4x1xi32>
    %141 = arith.cmpi eq, %132, %140 : vector<1x4x1xi32>
    %c28 = arith.constant 28 : index
    %142 = memref.load %arg0[%c28] : memref<32xf32, #tpu.memory_space<smem>>
    %143 = vector.broadcast %142 : f32 to vector<1x4x1xf32>
    %144 = arith.select %141, %143, %134 : vector<1x4x1xi1>, vector<1x4x1xf32>
    %c1_i32 = arith.constant 1 : i32
    %145 = vector.broadcast %c1_i32 : i32 to vector<1x4x1xi32>
    %146 = arith.cmpi eq, %132, %145 : vector<1x4x1xi32>
    %c25 = arith.constant 25 : index
    %147 = memref.load %arg0[%c25] : memref<32xf32, #tpu.memory_space<smem>>
    %148 = vector.broadcast %147 : f32 to vector<1x4x1xf32>
    %149 = arith.select %146, %148, %139 : vector<1x4x1xi1>, vector<1x4x1xf32>
    %c1_i32_21 = arith.constant 1 : i32
    %150 = vector.broadcast %c1_i32_21 : i32 to vector<1x4x1xi32>
    %151 = arith.cmpi eq, %132, %150 : vector<1x4x1xi32>
    %c29 = arith.constant 29 : index
    %152 = memref.load %arg0[%c29] : memref<32xf32, #tpu.memory_space<smem>>
    %153 = vector.broadcast %152 : f32 to vector<1x4x1xf32>
    %154 = arith.select %151, %153, %144 : vector<1x4x1xi1>, vector<1x4x1xf32>
    %c2_i32 = arith.constant 2 : i32
    %155 = vector.broadcast %c2_i32 : i32 to vector<1x4x1xi32>
    %156 = arith.cmpi eq, %132, %155 : vector<1x4x1xi32>
    %c26 = arith.constant 26 : index
    %157 = memref.load %arg0[%c26] : memref<32xf32, #tpu.memory_space<smem>>
    %158 = vector.broadcast %157 : f32 to vector<1x4x1xf32>
    %159 = arith.select %156, %158, %149 : vector<1x4x1xi1>, vector<1x4x1xf32>
    %c2_i32_22 = arith.constant 2 : i32
    %160 = vector.broadcast %c2_i32_22 : i32 to vector<1x4x1xi32>
    %161 = arith.cmpi eq, %132, %160 : vector<1x4x1xi32>
    %c30 = arith.constant 30 : index
    %162 = memref.load %arg0[%c30] : memref<32xf32, #tpu.memory_space<smem>>
    %163 = vector.broadcast %162 : f32 to vector<1x4x1xf32>
    %164 = arith.select %161, %163, %154 : vector<1x4x1xi1>, vector<1x4x1xf32>
    %c3_i32 = arith.constant 3 : i32
    %165 = vector.broadcast %c3_i32 : i32 to vector<1x4x1xi32>
    %166 = arith.cmpi eq, %132, %165 : vector<1x4x1xi32>
    %c27 = arith.constant 27 : index
    %167 = memref.load %arg0[%c27] : memref<32xf32, #tpu.memory_space<smem>>
    %168 = vector.broadcast %167 : f32 to vector<1x4x1xf32>
    %169 = arith.select %166, %168, %159 : vector<1x4x1xi1>, vector<1x4x1xf32>
    %c3_i32_23 = arith.constant 3 : i32
    %170 = vector.broadcast %c3_i32_23 : i32 to vector<1x4x1xi32>
    %171 = arith.cmpi eq, %132, %170 : vector<1x4x1xi32>
    %c31 = arith.constant 31 : index
    %172 = memref.load %arg0[%c31] : memref<32xf32, #tpu.memory_space<smem>>
    %173 = vector.broadcast %172 : f32 to vector<1x4x1xf32>
    %174 = arith.select %171, %173, %164 : vector<1x4x1xi1>, vector<1x4x1xf32>
    %cst_24 = arith.constant 9.99999974E-6 : f32
    %175 = vector.broadcast %cst_24 : f32 to vector<1x4x1xf32>
    %176 = arith.addf %131, %175 : vector<1x4x1xf32>
    %177 = math.rsqrt %176 : vector<1x4x1xf32>
    %178 = arith.mulf %169, %177 : vector<1x4x1xf32>
    %179 = arith.mulf %122, %178 : vector<1x4x1xf32>
    %180 = arith.subf %174, %179 : vector<1x4x1xf32>
    %181 = vector.broadcast %178 : vector<1x4x1xf32> to vector<2x4x15xf32>
    %182 = arith.mulf %116, %181 : vector<2x4x15xf32>
    %183 = vector.broadcast %180 : vector<1x4x1xf32> to vector<2x4x15xf32>
    %184 = arith.addf %182, %183 : vector<2x4x15xf32>
    %c0_25 = arith.constant 0 : index
    %c0_26 = arith.constant 0 : index
    %c0_27 = arith.constant 0 : index
    %185 = vector.load %arg2[%c0_25, %c0_26, %c0_27] : memref<2x4x15xf32, #tpu.memory_space<vmem>>, vector<2x4x15xf32>
    tpu.vector_store %arg2[%c0_25, %c0_26, %c0_27], %184 {strides = array<i32>} : memref<2x4x15xf32, #tpu.memory_space<vmem>>, vector<2x4x15xf32>,
    return
  }
}

</mosaic_0001>

<llo_original>
// kernel: tpu_custom_call.1
$region0: #{tpu_custom_call.1}
  #allocation0 [shape = 'u32[]', space=smem, size = 0x4, offset = 0x4, fixed_abs, tag = 'smem constant byte address 0x4 - core index']
  #allocation1 [shape = 'u32[144,128]{1,0:T(1,128)}', space=vmem, size = 0x12000, scoped, tag = 'internal scratch']
  %s0 = inlined_call_operand.vmem [shape: f32[32], index: 0, kind: input, shape index: {}]
  %s1 = inlined_call_operand.vmem [shape: f32[2,3,16], index: 1, kind: input, shape index: {}]
  %s2 = inlined_call_operand.hbm [shape: f32[2,4,15], index: 2, kind: output, shape index: {}]
  %s3 = sld [smem:[#allocation0]]
  $region22: #{tpu_custom_call.1} parent=0
    _
  %s5 = ssub.s32 1, %s3
  %s6 = scalar_select 0, %s5, %s3
  $region1: #{tpu_custom_call.1} parent=0
    #allocation2 [shape = 'u8[512]{0}', space=smem, size = 0x200, scoped, tag = 'input window, operand 0, single buffered']
    #allocation3 [shape = 's32[1]{0}', space=sflag, size = 0x4, scoped, tag = 'scoped memory for tpu_custom_call.1']
    #allocation4 [shape = 's32[1]{0}', space=sflag, size = 0x4, scoped, tag = 'scoped memory for tpu_custom_call.1']
    #allocation5 [shape = 'u8[4096]{0}', space=vmem, size = 0x1000, scoped, tag = 'output window, operand 0, single buffered']
    %7 = vsyncpa [#allocation4], 0
    %8 = vsyncpa [#allocation3], 0
    // Predicated region
    $region2: #{tpu_custom_call.1} parent=1 // pred_check
      _
    $region3: #{tpu_custom_call.1} parent=1 // pred_check_branch
      %10 = sbr.rel (0) target = $region5
    $region4: #{tpu_custom_call.1} parent=1 // pred_region
      %s12 = ssub.s32 16, 16
      %13 = vsyncadd [#allocation4], %s12
      %s15 = sshll.u32 %s0, 4
      %s16 = int_to_ptr.vmem [resolvable:$true] %s15
      %18 = dma.vmem_to_smem %s16, 16, [#allocation2], [#allocation4]
    $region5: #{tpu_custom_call.1} parent=1 // pred_fallthru
      _
    // Predicated region
    $region6: #{tpu_custom_call.1} parent=1 // pred_check
      _
    $region7: #{tpu_custom_call.1} parent=1 // pred_check_branch
      %20 = sbr.rel (0) target = $region9
    $region8: #{tpu_custom_call.1} parent=1 // pred_region
      _
    $region9: #{tpu_custom_call.1} parent=1 // pred_fallthru
      _
    // Predicated region
    $region10: #{tpu_custom_call.1} parent=1 // pred_check
      _
    $region11: #{tpu_custom_call.1} parent=1 // pred_check_branch
      %22 = sbr.rel (0) target = $region13
    $region12: #{tpu_custom_call.1} parent=1 // pred_region
      %23 = dma.done [#allocation4], 16
    $region13: #{tpu_custom_call.1} parent=1 // pred_fallthru
      _
    %24 = sfence
    %v25 = vld [vmem:[%s1] sm:$0x1]
    %v26 = vld [vmem:[%s1 + $0x4] sm:$0x1]
    %v27 = vld [vmem:[%s1 + $0x1] sm:$0x1]
    %v28 = vld [vmem:[%s1 + $0x5] sm:$0x1]
    %v29 = vld [vmem:[%s1 + $0x2] sm:$0x1]
    %v30 = vld [vmem:[%s1 + $0x6] sm:$0x1]
    %s31 = sld [smem:[#allocation2]]
    %v32 = vstv %s31
    %v33 = vmul.f32 %v32, %v25
    %v34 = vmul.f32 %v32, %v26
    %v35 = vadd.f32 %v33, 0.0
    %v36 = vadd.f32 %v34, 0.0
    %s37 = sld [smem:[#allocation2 + $0x1]]
    %v38 = vstv %s37
    %v39 = vmul.f32 %v38, %v25
    %v40 = vmul.f32 %v38, %v26
    %43 = vrot.lane.b32.xlu0 %v39, 127
    %v44 = vpop.permute.xlu0 %43
    %45 = vrot.lane.b32.xlu0 %v40, 127
    %v46 = vpop.permute.xlu0 %45
    %v49 = vadd.f32 %v35, %v44
    %v50 = vadd.f32 %v36, %v46
    %s51 = sld [smem:[#allocation2 + $0x2]]
    %v52 = vstv %s51
    %v53 = vmul.f32 %v52, %v27
    %v54 = vmul.f32 %v52, %v28
    %v55 = vadd.f32 %v49, %v53
    %v56 = vadd.f32 %v50, %v54
    %s57 = sld [smem:[#allocation2 + $0x3]]
    %v58 = vstv %s57
    %v59 = vmul.f32 %v58, %v27
    %v60 = vmul.f32 %v58, %v28
    %63 = vrot.lane.b32.xlu0 %v59, 127
    %v64 = vpop.permute.xlu0 %63
    %65 = vrot.lane.b32.xlu0 %v60, 127
    %v66 = vpop.permute.xlu0 %65
    %v69 = vadd.f32 %v55, %v64
    %v70 = vadd.f32 %v56, %v66
    %s71 = sld [smem:[#allocation2 + $0x4]]
    %v72 = vstv %s71
    %v73 = vmul.f32 %v72, %v29
    %v74 = vmul.f32 %v72, %v30
    %v75 = vadd.f32 %v69, %v73
    %v76 = vadd.f32 %v70, %v74
    %s77 = sld [smem:[#allocation2 + $0x5]]
    %v78 = vstv %s77
    %v79 = vmul.f32 %v78, %v29
    %v80 = vmul.f32 %v78, %v30
    %83 = vrot.lane.b32.xlu0 %v79, 127
    %v84 = vpop.permute.xlu0 %83
    %85 = vrot.lane.b32.xlu0 %v80, 127
    %v86 = vpop.permute.xlu0 %85
    %v89 = vadd.f32 %v75, %v84
    %v90 = vadd.f32 %v76, %v86
    %s91 = sld [smem:[#allocation2 + $0x6]]
    %v92 = vstv %s91
    %v93 = vmul.f32 %v92, %v25
    %v94 = vmul.f32 %v92, %v26
    %v95 = vadd.f32 %v93, 0.0
    %v96 = vadd.f32 %v94, 0.0
    %s97 = sld [smem:[#allocation2 + $0x7]]
    %v98 = vstv %s97
    %v99 = vmul.f32 %v98, %v25
    %v100 = vmul.f32 %v98, %v26
    %103 = vrot.lane.b32.xlu0 %v99, 127
    %v104 = vpop.permute.xlu0 %103
    %105 = vrot.lane.b32.xlu0 %v100, 127
    %v106 = vpop.permute.xlu0 %105
    %v109 = vadd.f32 %v95, %v104
    %v110 = vadd.f32 %v96, %v106
    %s111 = sld [smem:[#allocation2 + $0x8]]
    %v112 = vstv %s111
    %v113 = vmul.f32 %v112, %v27
    %v114 = vmul.f32 %v112, %v28
    %v115 = vadd.f32 %v109, %v113
    %v116 = vadd.f32 %v110, %v114
    %s117 = sld [smem:[#allocation2 + $0x9]]
    %v118 = vstv %s117
    %v119 = vmul.f32 %v118, %v27
    %v120 = vmul.f32 %v118, %v28
    %123 = vrot.lane.b32.xlu0 %v119, 127
    %v124 = vpop.permute.xlu0 %123
    %125 = vrot.lane.b32.xlu0 %v120, 127
    %v126 = vpop.permute.xlu0 %125
    %v129 = vadd.f32 %v115, %v124
    %v130 = vadd.f32 %v116, %v126
    %s131 = sld [smem:[#allocation2 + $0xa]]
    %v132 = vstv %s131
    %v133 = vmul.f32 %v132, %v29
    %v134 = vmul.f32 %v132, %v30
    %v135 = vadd.f32 %v129, %v133
    %v136 = vadd.f32 %v130, %v134
    %s137 = sld [smem:[#allocation2 + $0xb]]
    %v138 = vstv %s137
    %v139 = vmul.f32 %v138, %v29
    %v140 = vmul.f32 %v138, %v30
    %143 = vrot.lane.b32.xlu0 %v139, 127
    %v144 = vpop.permute.xlu0 %143
    %145 = vrot.lane.b32.xlu0 %v140, 127
    %v146 = vpop.permute.xlu0 %145
    %v149 = vadd.f32 %v135, %v144
    %v150 = vadd.f32 %v136, %v146
    %s151 = sld [smem:[#allocation2 + $0xc]]
    %v152 = vstv %s151
    %v153 = vmul.f32 %v152, %v25
    %v154 = vmul.f32 %v152, %v26
    %v155 = vadd.f32 %v153, 0.0
    %v156 = vadd.f32 %v154, 0.0
    %s157 = sld [smem:[#allocation2 + $0xd]]
    %v158 = vstv %s157
    %v159 = vmul.f32 %v158, %v25
    %v160 = vmul.f32 %v158, %v26
    %163 = vrot.lane.b32.xlu0 %v159, 127
    %v164 = vpop.permute.xlu0 %163
    %165 = vrot.lane.b32.xlu0 %v160, 127
    %v166 = vpop.permute.xlu0 %165
    %v169 = vadd.f32 %v155, %v164
    %v170 = vadd.f32 %v156, %v166
    %s171 = sld [smem:[#allocation2 + $0xe]]
    %v172 = vstv %s171
    %v173 = vmul.f32 %v172, %v27
    %v174 = vmul.f32 %v172, %v28
    %v175 = vadd.f32 %v169, %v173
    %v176 = vadd.f32 %v170, %v174
    %s177 = sld [smem:[#allocation2 + $0xf]]
    %v178 = vstv %s177
    %v179 = vmul.f32 %v178, %v27
    %v180 = vmul.f32 %v178, %v28
    %183 = vrot.lane.b32.xlu0 %v179, 127
    %v184 = vpop.permute.xlu0 %183
    %185 = vrot.lane.b32.xlu0 %v180, 127
    %v186 = vpop.permute.xlu0 %185
    %v189 = vadd.f32 %v175, %v184
    %v190 = vadd.f32 %v176, %v186
    %s191 = sld [smem:[#allocation2 + $0x10]]
    %v192 = vstv %s191
    %v193 = vmul.f32 %v192, %v29
    %v194 = vmul.f32 %v192, %v30
    %v195 = vadd.f32 %v189, %v193
    %v196 = vadd.f32 %v190, %v194
    %s197 = sld [smem:[#allocation2 + $0x11]]
    %v198 = vstv %s197
    %v199 = vmul.f32 %v198, %v29
    %v200 = vmul.f32 %v198, %v30
    %203 = vrot.lane.b32.xlu0 %v199, 127
    %v204 = vpop.permute.xlu0 %203
    %205 = vrot.lane.b32.xlu0 %v200, 127
    %v206 = vpop.permute.xlu0 %205
    %v209 = vadd.f32 %v195, %v204
    %v210 = vadd.f32 %v196, %v206
    %s211 = sld [smem:[#allocation2 + $0x12]]
    %v212 = vstv %s211
    %v213 = vmul.f32 %v212, %v25
    %v214 = vmul.f32 %v212, %v26
    %v215 = vadd.f32 %v213, 0.0
    %v216 = vadd.f32 %v214, 0.0
    %s217 = sld [smem:[#allocation2 + $0x13]]
    %v218 = vstv %s217
    %v219 = vmul.f32 %v218, %v25
    %v220 = vmul.f32 %v218, %v26
    %223 = vrot.lane.b32.xlu0 %v219, 127
    %v224 = vpop.permute.xlu0 %223
    %225 = vrot.lane.b32.xlu0 %v220, 127
    %v226 = vpop.permute.xlu0 %225
    %v229 = vadd.f32 %v215, %v224
    %v230 = vadd.f32 %v216, %v226
    %s231 = sld [smem:[#allocation2 + $0x14]]
    %v232 = vstv %s231
    %v233 = vmul.f32 %v232, %v27
    %v234 = vmul.f32 %v232, %v28
    %v235 = vadd.f32 %v229, %v233
    %v236 = vadd.f32 %v230, %v234
    %s237 = sld [smem:[#allocation2 + $0x15]]
    %v238 = vstv %s237
    %v239 = vmul.f32 %v238, %v27
    %v240 = vmul.f32 %v238, %v28
    %243 = vrot.lane.b32.xlu0 %v239, 127
    %v244 = vpop.permute.xlu0 %243
    %245 = vrot.lane.b32.xlu0 %v240, 127
    %v246 = vpop.permute.xlu0 %245
    %v249 = vadd.f32 %v235, %v244
    %v250 = vadd.f32 %v236, %v246
    %s251 = sld [smem:[#allocation2 + $0x16]]
    %v252 = vstv %s251
    %v253 = vmul.f32 %v252, %v29
    %v254 = vmul.f32 %v252, %v30
    %v255 = vadd.f32 %v249, %v253
    %v256 = vadd.f32 %v250, %v254
    %s257 = sld [smem:[#allocation2 + $0x17]]
    %v258 = vstv %s257
    %v259 = vmul.f32 %v258, %v29
    %v260 = vmul.f32 %v258, %v30
    %263 = vrot.lane.b32.xlu0 %v259, 127
    %v264 = vpop.permute.xlu0 %263
    %265 = vrot.lane.b32.xlu0 %v260, 127
    %v266 = vpop.permute.xlu0 %265
    %v269 = vadd.f32 %v255, %v264
    %v270 = vadd.f32 %v256, %v266
    %v273 = vrot.slane %v149, 7
    %v274 = vrot.slane %v150, 7
    %v279 = vrot.slane %v209, 6
    %v280 = vrot.slane %v210, 6
    %v285 = vrot.slane %v269, 5
    %v286 = vrot.slane %v270, 5
    %vm289 = vcmask 1040384
    %v290 = vsel %vm289, %v89, %v273
    %v291 = vsel %vm289, %v90, %v274
    %vm292 = vcmask 1041408
    %v293 = vsel %vm292, %v290, %v279
    %v294 = vsel %vm292, %v291, %v280
    %vm295 = vcmask 1042432
    %v296 = vsel %vm295, %v293, %v285
    %v297 = vsel %vm295, %v294, %v286
    %vm298 = vcmask 117760
    %v299 = vsel %vm298, %v296, 0.0
    %300 = vadd.xlane.f32.xlu0 %v299
    %v301 = vpop.xlane.xlu0 %300
    %v302 = vsel %vm298, %v297, 0.0
    %303 = vadd.xlane.f32.xlu0 %v302
    %v304 = vpop.xlane.xlu0 %303
    %vm305 = vcmask 1043456
    %v306 = vsel %vm305, %v301, 0.0
    %v307 = vsel %vm305, %v304, 0.0
    %v308 = vadd.f32 %v306, %v307
    %v309 = vmul.f32 %v308, 0.033333335
    %v310 = vsub.f32 %v296, %v309
    %v311 = vsub.f32 %v297, %v309
    %v312 = vmul.f32 %v310, %v310
    %v313 = vmul.f32 %v311, %v311
    %v314 = vsel %vm298, %v312, 0.0
    %315 = vadd.xlane.f32.xlu0 %v314
    %v316 = vpop.xlane.xlu0 %315
    %v317 = vsel %vm298, %v313, 0.0
    %318 = vadd.xlane.f32.xlu0 %v317
    %v319 = vpop.xlane.xlu0 %318
    %v320 = vsel %vm305, %v316, 0.0
    %v321 = vsel %vm305, %v319, 0.0
    %v322 = vadd.f32 %v320, %v321
    %v323 = vmul.f32 %v322, 0.033333335
    %v324 = vlaneseq
    %v325 = vshrl.u32 %v324, 7
    %vm326 = vcmp.eq.s32.totalorder %v325, 0
    %s327 = sld [smem:[#allocation2 + $0x18]]
    %v328 = vstv %s327
    %v329 = vsel %vm326, %v328, 0.0
    %s330 = sld [smem:[#allocation2 + $0x1c]]
    %v331 = vstv %s330
    %v332 = vsel %vm326, %v331, 0.0
    %vm333 = vcmp.eq.s32.totalorder %v325, 1
    %s334 = sld [smem:[#allocation2 + $0x19]]
    %v335 = vstv %s334
    %v336 = vsel %vm333, %v335, %v329
    %s337 = sld [smem:[#allocation2 + $0x1d]]
    %v338 = vstv %s337
    %v339 = vsel %vm333, %v338, %v332
    %vm340 = vcmp.eq.s32.totalorder %v325, 2
    %s341 = sld [smem:[#allocation2 + $0x1a]]
    %v342 = vstv %s341
    %v343 = vsel %vm340, %v342, %v336
    %s344 = sld [smem:[#allocation2 + $0x1e]]
    %v345 = vstv %s344
    %v346 = vsel %vm340, %v345, %v339
    %vm347 = vcmp.eq.s32.totalorder %v325, 3
    %s348 = sld [smem:[#allocation2 + $0x1b]]
    %v349 = vstv %s348
    %v350 = vsel %vm347, %v349, %v343
    %s351 = sld [smem:[#allocation2 + $0x1f]]
    %v352 = vstv %s351
    %v353 = vsel %vm347, %v352, %v346
    %v354 = vadd.f32 %v323, 1e-05
    %v355 = vrsqrt.pop %v354
    %v356 = vmul.f32 %v350, %v355
    %v357 = vmul.f32 %v309, %v356
    %v358 = vsub.f32 %v353, %v357
    %v359 = vmul.f32 %v296, %v356
    %v360 = vmul.f32 %v297, %v356
    %v361 = vadd.f32 %v359, %v358
    %v362 = vadd.f32 %v360, %v358
    %363 = vst.msk [vmem:[#allocation5] sm:$0xf] %vm298, %v361
    %364 = vst.msk [vmem:[#allocation5 + $0x4] sm:$0xf] %vm298, %v362
    // Predicated region
    $region14: #{tpu_custom_call.1} parent=1 // pred_check
      _
    $region15: #{tpu_custom_call.1} parent=1 // pred_check_branch
      %366 = sbr.rel (0) target = $region17
    $region16: #{tpu_custom_call.1} parent=1 // pred_region
      %s368 = ssub.s32 128, 128
      %369 = vsyncadd [#allocation3], %s368
      %s370 = sshll.u32 [#allocation5], 4
      %s371 = int_to_ptr.vmem [resolvable:$true] %s370
      %376 = dma.vmem_to_hbm [thread:$0]  %s371, 128, %s2, [#allocation3], 64, 64, 4
    $region17: #{tpu_custom_call.1} parent=1 // pred_fallthru
      _
    // Predicated region
    $region18: #{tpu_custom_call.1} parent=1 // pred_check
      _
    $region19: #{tpu_custom_call.1} parent=1 // pred_check_branch
      %378 = sbr.rel (0) target = $region21
    $region20: #{tpu_custom_call.1} parent=1 // pred_region
      %379 = dma.done [#allocation3], 128
    $region21: #{tpu_custom_call.1} parent=1 // pred_fallthru
      _
    %380 = vsyncpa [#allocation3], 1
    %381 = vsyncpa [#allocation4], 1

</llo_original>
